<compile_context>
chip_gen: v7x
topology: tpu7x:2x2x1
jax: 0.10.0
libtpu: 0.0.40
codegen_flags: <defaults>
</compile_context>

<pallas_src>
import jax
import jax.numpy as jnp
from jax.experimental import pallas as pl
from jax.experimental.pallas import tpu as pltpu

# Below this many bytes a plain (XLA-fused) multiply beats any pallas_call:
# launch + grid setup dwarf the sub-microsecond of useful VPU work.
_SMALL_INPUT_BYTES = 256 * 1024
# Single-tile safety cap (double-buffered in+out must fit every generation's
# scoped-VMEM default: v5e 16 MiB, v6e/v7x 32 MiB).
_MAX_TILE_BYTES = 6 * 1024 * 1024


def _scale_kernel(scale_ref, x_ref, o_ref):
    # scale_ref: (1,) f32 in SMEM; x_ref / o_ref: (TR, W) tiles in VMEM.
    # Multiply in the tile's native dtype (bf16 is VPU-native on v6e/v7x);
    # the scalar cast is a single scalar-unit op.  f32 inputs are unchanged.
    s = scale_ref[0].astype(x_ref.dtype)
    o_ref[...] = (x_ref[...] * s).astype(o_ref.dtype)


def _pick_row_tile(rows, row_bytes):
    """Pick the row tile: ~2 MiB tiles (near HBM roofline; 4x tile stays well
    under v5e's 16 MiB scoped-VMEM default) while keeping the grid length >= 2
    so v7x's two TensorCores each stream half the slab."""
    if rows <= 8:
        return rows
    target = max(8, (2 * 1024 * 1024) // max(1, row_bytes))
    tr = min(target, rows // 2)
    tr = max(8, (tr // 8) * 8)
    return min(tr, rows)


def _fallback_scale(scale, x):
    dtype = x.dtype
    return (x * scale[0].astype(dtype)).astype(dtype)


def _scale_array_pallas(scale, x):
    """Multiply an arbitrary-shape array by a scalar; no pad/slice HBM passes."""
    orig_shape, dtype = x.shape, x.dtype
    n = x.size
    itemsize = jnp.dtype(dtype).itemsize

    # Tiny inputs (incl. the module's nominal [seq, features] sample):
    # a fused XLA multiply is strictly faster than a kernel launch.
    if n * itemsize < _SMALL_INPUT_BYTES:
        return _fallback_scale(scale, x)

    last = orig_shape[-1]
    if x.ndim == 2 and last >= 128:
        slab = x                               # lane-friendly already: no copy
    elif x.ndim >= 2 and last >= 128:
        slab = x.reshape(-1, last)             # collapse leading dims only
    elif n % 512 == 0:
        # Narrow last dim: re-slab to 512 lanes so stores are full-lane `vst`
        # instead of <=6%-utilized masked stores (one relayout, big net win).
        slab = x.reshape(-1, 512)
    elif n % 128 == 0:
        slab = x.reshape(-1, 128)
    elif x.ndim >= 2:
        slab = x.reshape(-1, last)             # rare odd shape: correctness first
    else:
        slab = x.reshape(1, n)

    rows, w = slab.shape
    tr = _pick_row_tile(rows, w * itemsize)
    if tr * w * itemsize > _MAX_TILE_BYTES:
        # Pathological aspect ratio (e.g. huge odd-length vector): stay safe.
        return _fallback_scale(scale, x)

    grid = (pl.cdiv(rows, tr),)                # ragged last block handled by Pallas

    out = pl.pallas_call(
        _scale_kernel,
        out_shape=jax.ShapeDtypeStruct((rows, w), dtype),
        grid=grid,
        in_specs=[
            pl.BlockSpec(memory_space=pltpu.MemorySpace.SMEM),   # scale (1,) f32
            pl.BlockSpec((tr, w), lambda i: (i, 0)),             # x row-tile
        ],
        out_specs=pl.BlockSpec((tr, w), lambda i: (i, 0)),
        compiler_params=pltpu.CompilerParams(
            dimension_semantics=("parallel",),                   # megacore-friendly
        ),
        cost_estimate=pl.CostEstimate(
            flops=n, transcendentals=0, bytes_accessed=2 * n * itemsize),
    )(scale, slab)

    return out.reshape(orig_shape)


def scaling_sequence(key, x, y):
    """Forward pass of ScalingSequence: (x, y) -> (x*scale, y*scale), scale~N(1, 0.05)."""
    # TODO(synk): torch.normal's RNG stream cannot be reproduced bit-for-bit;
    # the scalar is drawn with jax.random instead.
    scale = 1.0 + 0.05 * jax.random.normal(key, (1,), dtype=jnp.float32)

    x_out = _scale_array_pallas(scale, x)
    # y is a single [1, 1] target: one scalar multiply (a dedicated padded VMEM
    # tile + DMA in the kernel would be pure overhead).
    y_out = (y.astype(jnp.float32) * scale[0]).astype(y.dtype)
    return (x_out, y_out), scale


if __name__ == "__main__":
    key = jax.random.PRNGKey(0)
    k_x, k_y, k_s, k_big, k_narrow = jax.random.split(key, 5)

    # Nominal module shapes: a [seq, features] sequence + a [1, 1] target.
    S, F = 16, 8
    x = jax.random.normal(k_x, (S, F), dtype=jnp.float32)
    y = jax.random.normal(k_y, (1, 1), dtype=jnp.float32)

    (x_out, y_out), scale = scaling_sequence(k_s, x, y)
    jax.block_until_ready((x_out, y_out))
    assert x_out.shape == (S, F) and y_out.shape == (1, 1)
    assert jnp.allclose(x_out, x * scale[0], atol=1e-6, rtol=1e-6)
    assert jnp.allclose(y_out, y * scale[0], atol=1e-6, rtol=1e-6)

    # Larger sequence: un-padded full-last-dim blocks, cdiv grid with a ragged
    # last row-tile (500 rows, 248-row tiles -> grid 3, last block masked).
    x_big = jax.random.normal(k_big, (500, 300), dtype=jnp.float32)
    (xb_out, yb_out), scale_b = scaling_sequence(k_s, x_big, y)
    jax.block_until_ready(xb_out)
    assert xb_out.shape == x_big.shape
    assert jnp.allclose(xb_out, x_big * scale_b[0], atol=1e-6, rtol=1e-6)

    # Long, narrow sequence: exercises the lane-dense 512-wide re-slab path.
    x_narrow = jax.random.normal(k_narrow, (65536, 8), dtype=jnp.float32)
    (xn_out, _), scale_n = scaling_sequence(k_s, x_narrow, y)
    jax.block_until_ready(xn_out)
    assert xn_out.shape == x_narrow.shape
    assert jnp.allclose(xn_out, x_narrow * scale_n[0], atol=1e-6, rtol=1e-6)

    print("KERNEL_OK")
</pallas_src>

<mosaic_0001>
module attributes {stable_mosaic.version = 11 : i64} {
  func.func @_scale_kernel(%arg0: i32, %arg1: memref<1xf32, #tpu.memory_space<smem>>, %arg2: memref<248x300xf32, #tpu.memory_space<vmem>>, %arg3: memref<248x300xf32, #tpu.memory_space<vmem>>) attributes {dimension_semantics = [#tpu.dimension_semantics<parallel>], iteration_bounds = array<i64: 3>, scalar_prefetch = 0 : i64, scratch_operands = 0 : i64, tpu.core_type = #tpu.core_type<tc>, window_params = [{transform_indices = @transform_0, window_bounds = array<i64: 1>}, {transform_indices = @transform_1, window_bounds = array<i64: 248, 300>}, {transform_indices = @transform_2, window_bounds = array<i64: 248, 300>}]} {
    %c0 = arith.constant 0 : index
    %0 = memref.load %arg1[%c0] : memref<1xf32, #tpu.memory_space<smem>>
    %c0_0 = arith.constant 0 : index
    %c0_1 = arith.constant 0 : index
    %1 = vector.load %arg2[%c0_0, %c0_1] : memref<248x300xf32, #tpu.memory_space<vmem>>, vector<248x300xf32>
    %2 = vector.broadcast %0 : f32 to vector<248x300xf32>
    %3 = arith.mulf %1, %2 : vector<248x300xf32>
    %c0_2 = arith.constant 0 : index
    %c0_3 = arith.constant 0 : index
    %4 = vector.load %arg3[%c0_2, %c0_3] : memref<248x300xf32, #tpu.memory_space<vmem>>, vector<248x300xf32>
    tpu.vector_store %arg3[%c0_2, %c0_3], %3 {strides = array<i32>} : memref<248x300xf32, #tpu.memory_space<vmem>>, vector<248x300xf32>,
    return
  }
  func.func @transform_0(%arg0: i32) -> i32 {
    %c0_i32 = arith.constant 0 : i32
    %c0_i32_0 = arith.constant 0 : i32
    return %c0_i32 : i32
  }
  func.func @transform_1(%arg0: i32) -> (i32, i32) {
    %c0_i32 = arith.constant 0 : i32
    %c0_i32_0 = arith.constant 0 : i32
    return %arg0, %c0_i32 : i32, i32
  }
  func.func @transform_2(%arg0: i32) -> (i32, i32) {
    %c0_i32 = arith.constant 0 : i32
    %c0_i32_0 = arith.constant 0 : i32
    return %arg0, %c0_i32 : i32, i32
  }
}

</mosaic_0001>

<llo_original>
// kernel: tpu_custom_call.1
$region0: #{tpu_custom_call.1}
  #allocation0 [shape = 'u32[]', space=smem, size = 0x4, offset = 0x4, fixed_abs, tag = 'smem constant byte address 0x4 - core index']
  #allocation1 [shape = 'u32[144,128]{1,0:T(1,128)}', space=vmem, size = 0x12000, scoped, tag = 'internal scratch']
  #allocation2 [shape = 'f32[1]{0:T(128)S(6)}', space=smem, size = 0x200, scoped, tag = 'scoped memory for tpu_custom_call.1']
  %s0 = inlined_call_operand.<no memory space> [shape: f32[1], index: 0, kind: input, shape index: {}]
  %s1 = inlined_call_operand.vmem [shape: f32[500,300], index: 1, kind: input, shape index: {}]
  %s2 = inlined_call_operand.vmem [shape: f32[500,300], index: 2, kind: output, shape index: {}]
  %s3 = sld [smem:[#allocation0]]
  $region67: #{tpu_custom_call.1} parent=0
    _
  %s5 = ssub.s32 1, %s3
  %s6 = scalar_select 0, %s5, %s3
  %7 = sst [smem:[#allocation2]] %s0
  $region1: #{tpu_custom_call.1} parent=0
    #allocation3 [shape = 'u8[761856]{0}', space=vmem, size = 0xba000, scoped, tag = 'output window, operand 0']
    loop: start=0, step=1, limit=5
    $region2: #{tpu_custom_call.1} parent=1 // loop_pre_header
      _
    $region3: #{tpu_custom_call.1} parent=1 // loop_header
      %s9 = sphi 0, %s13
      %p10 = scmp.ge.s32.totalorder %s9, 5
      %s17 = sphi 0, %s17
      %s19 = sphi 0, %s17
      %s20 = sphi 0, %s19
      %s34 = sphi 0, %s20
      %s40 = sphi 0, %s42
      %s43 = sphi 0, %s40
      %s44 = sphi 0, %s43
      %s60 = sphi 0, %s44
      %s66 = sphi 0, %s68
      %s69 = sphi 0, %s66
      %s70 = sphi 0, %s69
      %s86 = sphi 0, %s70
    $region4: #{tpu_custom_call.1} parent=1 // loop_header_branch
      %12 = sbr.rel (%p10) target = $region8
    $region5: #{tpu_custom_call.1} parent=1 // loop_body
      %s14 = ssub.s32 %s9, 1
      %s15 = ssub.s32 %s9, 2
      %s16 = sadd.s32 %s9, 1
      %s18 = sadd.s32 %s17, 1
      %p21 = scmp.eq.s32.totalorder %s9, 2
      %p22 = scmp.ne.s32.totalorder %s17, %s19
      %p23 = scmp.eq.s32.totalorder %s9, 0
      %p24 = por %p22, %p23
      %p25 = scmp.ne.s32.totalorder %s17, %s19
      %p26 = scmp.eq.s32.totalorder %s14, 2
      %p27 = por %p25, %p26
      %p28 = scmp.ne.s32.totalorder %s19, %s20
      %p29 = scmp.eq.s32.totalorder %s14, 0
      %p30 = por %p28, %p29
      %p31 = scmp.ne.s32.totalorder %s19, %s20
      %p32 = scmp.eq.s32.totalorder %s15, 2
      %p33 = por %p31, %p32
      %p35 = scmp.ne.s32.totalorder %s20, %s34
      %p36 = scmp.eq.s32.totalorder %s15, 0
      %p37 = por %p35, %p36
      %s38 = ssub.s32 %s9, %s16
      %p39 = scmp.eq.s32.totalorder %s38, 0
      %s41 = sadd.s32 %s40, 1
      %s42 = scalar_select %p39, %s40, %s41
      %p45 = pneg %p39
      %p46 = scmp.eq.s32.totalorder %s9, 2
      %p47 = por %p45, %p46
      %p48 = scmp.ne.s32.totalorder %s40, %s43
      %p49 = scmp.eq.s32.totalorder %s9, 0
      %p50 = por %p48, %p49
      %p51 = scmp.ne.s32.totalorder %s40, %s43
      %p52 = scmp.eq.s32.totalorder %s14, 2
      %p53 = por %p51, %p52
      %p54 = scmp.ne.s32.totalorder %s43, %s44
      %p55 = scmp.eq.s32.totalorder %s14, 0
      %p56 = por %p54, %p55
      %p57 = scmp.ne.s32.totalorder %s43, %s44
      %p58 = scmp.eq.s32.totalorder %s15, 2
      %p59 = por %p57, %p58
      %p61 = scmp.ne.s32.totalorder %s44, %s60
      %p62 = scmp.eq.s32.totalorder %s15, 0
      %p63 = por %p61, %p62
      %s64 = ssub.s32 %s9, %s16
      %p65 = scmp.eq.s32.totalorder %s64, 0
      %s67 = sadd.s32 %s66, 1
      %s68 = scalar_select %p65, %s66, %s67
      %p71 = pneg %p65
      %p72 = scmp.eq.s32.totalorder %s9, 2
      %p73 = por %p71, %p72
      %p74 = scmp.ne.s32.totalorder %s66, %s69
      %p75 = scmp.eq.s32.totalorder %s9, 0
      %p76 = por %p74, %p75
      %p77 = scmp.ne.s32.totalorder %s66, %s69
      %p78 = scmp.eq.s32.totalorder %s14, 2
      %p79 = por %p77, %p78
      %p80 = scmp.ne.s32.totalorder %s69, %s70
      %p81 = scmp.eq.s32.totalorder %s14, 0
      %p82 = por %p80, %p81
      %p83 = scmp.ne.s32.totalorder %s69, %s70
      %p84 = scmp.eq.s32.totalorder %s15, 2
      %p85 = por %p83, %p84
      %p87 = scmp.ne.s32.totalorder %s70, %s86
      %p88 = scmp.eq.s32.totalorder %s15, 0
      %p89 = por %p87, %p88
      %p90 = scmp.le.s32.totalorder 1, %s9
      %p91 = scmp.lt.s32.totalorder %s9, 4
      %p92 = pnand %p90, %p91
      %p93 = pneg %p92
      // Predicated region
      $region9: #{tpu_custom_call.1} parent=5 // pred_check
        _
      $region10: #{tpu_custom_call.1} parent=5 // pred_check_branch
        %95 = sbr.rel (%p92) target = $region12
      $region11: #{tpu_custom_call.1} parent=5 // pred_region
        %s96 = ssub.s32 %s9, 1
        // Predicated region
        $region13: #{tpu_custom_call.1} parent=11 // pred_check
          %p97 = pneg %p30
        $region14: #{tpu_custom_call.1} parent=11 // pred_check_branch
          %99 = sbr.rel (%p97) target = $region16
        $region15: #{tpu_custom_call.1} parent=11 // pred_region
          _
        $region16: #{tpu_custom_call.1} parent=11 // pred_fallthru
          _
      $region12: #{tpu_custom_call.1} parent=5 // pred_fallthru
        _
      %p100 = scmp.lt.s32.totalorder %s9, 3
      // Predicated region
      $region17: #{tpu_custom_call.1} parent=5 // pred_check
        %p101 = pneg %p100
      $region18: #{tpu_custom_call.1} parent=5 // pred_check_branch
        %103 = sbr.rel (%p101) target = $region20
      $region19: #{tpu_custom_call.1} parent=5 // pred_region
        // Predicated region
        $region21: #{tpu_custom_call.1} parent=19 // pred_check
          %p104 = pneg %p50
        $region22: #{tpu_custom_call.1} parent=19 // pred_check_branch
          %106 = sbr.rel (%p104) target = $region24
        $region23: #{tpu_custom_call.1} parent=19 // pred_region
          %s107 = smul.u32 31, %s9
          %s108 = ssub.s32 63, %s107
          %p109 = scmp.lt.s32.totalorder %s108, 31
          %s110 = scalar_select %p109, %s108, 31
          %s111 = smul.u32 128, %s110
          %s112 = smul.u32 %s111, 3
          %p113 = scmp.lt.s32.totalorder %s107, 62
          %s114 = scalar_select %p113, %s107, 62
          %s115 = smul.addr %s114, 3
          %s116 = smul.addr %s115, 8
          %s117 = scalar_lea.vmem %s1, %s116
          %s118 = smul.u32 31, %s9
          %s119 = ssub.s32 63, %s118
          %p120 = scmp.lt.s32.totalorder %s119, 31
          %s121 = scalar_select %p120, %s119, 31
          %s122 = smul.u32 128, %s121
          %s123 = smul.u32 %s122, 3
        $region24: #{tpu_custom_call.1} parent=19 // pred_fallthru
          _
      $region20: #{tpu_custom_call.1} parent=5 // pred_fallthru
        _
      %p124 = scmp.le.s32.totalorder 1, %s9
      %p125 = scmp.lt.s32.totalorder %s9, 4
      %p126 = pnand %p124, %p125
      %p127 = pneg %p126
      // Predicated region
      $region25: #{tpu_custom_call.1} parent=5 // pred_check
        _
      $region26: #{tpu_custom_call.1} parent=5 // pred_check_branch
        %129 = sbr.rel (%p126) target = $region28
      $region27: #{tpu_custom_call.1} parent=5 // pred_region
        %s130 = ssub.s32 %s9, 1
        %p131 = pneg %p30
        %p132 = pneg %p27
        %s133 = smul.u32 31, %s14
        %s134 = ssub.s32 63, %s133
        %p135 = scmp.lt.s32.totalorder %s134, 31
        %s136 = scalar_select %p135, %s134, 31
        %s137 = smul.u32 128, %s136
        %s138 = smul.u32 %s137, 3
        %p139 = scmp.lt.s32.totalorder %s133, 62
        %s140 = scalar_select %p139, %s133, 62
        %s141 = smul.addr %s140, 3
        %s142 = smul.addr %s141, 8
        %s143 = scalar_lea.vmem %s1, %s142
        %p144 = pneg %p56
        %p145 = pneg %p53
        %p146 = pneg %p82
        %p147 = pneg %p79
        %s148 = sand.u32 %s69, 1
        %s149 = sand.u32 %s69, 1
        %s150 = smul.addr %s149, 744
        %s151 = scalar_lea.vmem [#allocation3], %s150
        %s152 = smul.u32 31, %s14
        %s153 = ssub.s32 63, %s152
        %p154 = scmp.lt.s32.totalorder %s153, 31
        %s155 = scalar_select %p154, %s153, 31
        %s156 = smul.u32 128, %s155
        %s157 = smul.u32 %s156, 3
        %p158 = scmp.lt.s32.totalorder %s152, 62
        %s159 = scalar_select %p158, %s152, 62
        %s160 = smul.addr %s159, 3
        %s161 = smul.addr %s160, 8
        %s162 = scalar_lea.vmem %s1, %s161
        %s163 = smul.u32 31, %s14
        %s164 = ssub.s32 63, %s163
        %p165 = scmp.lt.s32.totalorder %s164, 31
        %s166 = scalar_select %p165, %s164, 31
        %s167 = smul.u32 128, %s166
        %s168 = smul.u32 %s167, 3
        %s169 = smul.u32 31, %s14
        %s170 = ssub.s32 63, %s169
        %p171 = scmp.lt.s32.totalorder %s170, 31
        %s172 = scalar_select %p171, %s170, 31
        %s173 = smul.u32 128, %s172
        %s174 = smul.u32 %s173, 3
        %s175 = sld [smem:[#allocation2]]
        %v176 = vld [vmem:[%s162] sm:$0xff]
        %v177 = vld [vmem:[%s162 + $0x8] sm:$0xff]
        %v178 = vld [vmem:[%s162 + $0x10] sm:$0xff]
        %v179 = vld [vmem:[%s162 + $0x18] sm:$0xff]
        %v180 = vld [vmem:[%s162 + $0x20] sm:$0xff]
        %v181 = vld [vmem:[%s162 + $0x28] sm:$0xff]
        %v182 = vld [vmem:[%s162 + $0x30] sm:$0xff]
        %v183 = vld [vmem:[%s162 + $0x38] sm:$0xff]
        %v184 = vld [vmem:[%s162 + $0x40] sm:$0xff]
        %v185 = vld [vmem:[%s162 + $0x48] sm:$0xff]
        %v186 = vld [vmem:[%s162 + $0x50] sm:$0xff]
        %v187 = vld [vmem:[%s162 + $0x58] sm:$0xff]
        %v188 = vld [vmem:[%s162 + $0x60] sm:$0xff]
        %v189 = vld [vmem:[%s162 + $0x68] sm:$0xff]
        %v190 = vld [vmem:[%s162 + $0x70] sm:$0xff]
        %v191 = vld [vmem:[%s162 + $0x78] sm:$0xff]
        %v192 = vld [vmem:[%s162 + $0x80] sm:$0xff]
        %v193 = vld [vmem:[%s162 + $0x88] sm:$0xff]
        %v194 = vld [vmem:[%s162 + $0x90] sm:$0xff]
        %v195 = vld [vmem:[%s162 + $0x98] sm:$0xff]
        %v196 = vld [vmem:[%s162 + $0xa0] sm:$0xff]
        %v197 = vld [vmem:[%s162 + $0xa8] sm:$0xff]
        %v198 = vld [vmem:[%s162 + $0xb0] sm:$0xff]
        %v199 = vld [vmem:[%s162 + $0xb8] sm:$0xff]
        %v200 = vld [vmem:[%s162 + $0xc0] sm:$0xff]
        %v201 = vld [vmem:[%s162 + $0xc8] sm:$0xff]
        %v202 = vld [vmem:[%s162 + $0xd0] sm:$0xff]
        %v203 = vld [vmem:[%s162 + $0xd8] sm:$0xff]
        %v204 = vld [vmem:[%s162 + $0xe0] sm:$0xff]
        %v205 = vld [vmem:[%s162 + $0xe8] sm:$0xff]
        %v206 = vld [vmem:[%s162 + $0xf0] sm:$0xff]
        %v207 = vld [vmem:[%s162 + $0xf8] sm:$0xff]
        %v208 = vld [vmem:[%s162 + $0x100] sm:$0xff]
        %v209 = vld [vmem:[%s162 + $0x108] sm:$0xff]
        %v210 = vld [vmem:[%s162 + $0x110] sm:$0xff]
        %v211 = vld [vmem:[%s162 + $0x118] sm:$0xff]
        %v212 = vld [vmem:[%s162 + $0x120] sm:$0xff]
        %v213 = vld [vmem:[%s162 + $0x128] sm:$0xff]
        %v214 = vld [vmem:[%s162 + $0x130] sm:$0xff]
        %v215 = vld [vmem:[%s162 + $0x138] sm:$0xff]
        %v216 = vld [vmem:[%s162 + $0x140] sm:$0xff]
        %v217 = vld [vmem:[%s162 + $0x148] sm:$0xff]
        %v218 = vld [vmem:[%s162 + $0x150] sm:$0xff]
        %v219 = vld [vmem:[%s162 + $0x158] sm:$0xff]
        %v220 = vld [vmem:[%s162 + $0x160] sm:$0xff]
        %v221 = vld [vmem:[%s162 + $0x168] sm:$0xff]
        %v222 = vld [vmem:[%s162 + $0x170] sm:$0xff]
        %v223 = vld [vmem:[%s162 + $0x178] sm:$0xff]
        %v224 = vld [vmem:[%s162 + $0x180] sm:$0xff]
        %v225 = vld [vmem:[%s162 + $0x188] sm:$0xff]
        %v226 = vld [vmem:[%s162 + $0x190] sm:$0xff]
        %v227 = vld [vmem:[%s162 + $0x198] sm:$0xff]
        %v228 = vld [vmem:[%s162 + $0x1a0] sm:$0xff]
        %v229 = vld [vmem:[%s162 + $0x1a8] sm:$0xff]
        %v230 = vld [vmem:[%s162 + $0x1b0] sm:$0xff]
        %v231 = vld [vmem:[%s162 + $0x1b8] sm:$0xff]
        %v232 = vld [vmem:[%s162 + $0x1c0] sm:$0xff]
        %v233 = vld [vmem:[%s162 + $0x1c8] sm:$0xff]
        %v234 = vld [vmem:[%s162 + $0x1d0] sm:$0xff]
        %v235 = vld [vmem:[%s162 + $0x1d8] sm:$0xff]
        %v236 = vld [vmem:[%s162 + $0x1e0] sm:$0xff]
        %v237 = vld [vmem:[%s162 + $0x1e8] sm:$0xff]
        %v238 = vld [vmem:[%s162 + $0x1f0] sm:$0xff]
        %v239 = vld [vmem:[%s162 + $0x1f8] sm:$0xff]
        %v240 = vld [vmem:[%s162 + $0x200] sm:$0xff]
        %v241 = vld [vmem:[%s162 + $0x208] sm:$0xff]
        %v242 = vld [vmem:[%s162 + $0x210] sm:$0xff]
        %v243 = vld [vmem:[%s162 + $0x218] sm:$0xff]
        %v244 = vld [vmem:[%s162 + $0x220] sm:$0xff]
        %v245 = vld [vmem:[%s162 + $0x228] sm:$0xff]
        %v246 = vld [vmem:[%s162 + $0x230] sm:$0xff]
        %v247 = vld [vmem:[%s162 + $0x238] sm:$0xff]
        %v248 = vld [vmem:[%s162 + $0x240] sm:$0xff]
        %v249 = vld [vmem:[%s162 + $0x248] sm:$0xff]
        %v250 = vld [vmem:[%s162 + $0x250] sm:$0xff]
        %v251 = vld [vmem:[%s162 + $0x258] sm:$0xff]
        %v252 = vld [vmem:[%s162 + $0x260] sm:$0xff]
        %v253 = vld [vmem:[%s162 + $0x268] sm:$0xff]
        %v254 = vld [vmem:[%s162 + $0x270] sm:$0xff]
        %v255 = vld [vmem:[%s162 + $0x278] sm:$0xff]
        %v256 = vld [vmem:[%s162 + $0x280] sm:$0xff]
        %v257 = vld [vmem:[%s162 + $0x288] sm:$0xff]
        %v258 = vld [vmem:[%s162 + $0x290] sm:$0xff]
        %v259 = vld [vmem:[%s162 + $0x298] sm:$0xff]
        %v260 = vld [vmem:[%s162 + $0x2a0] sm:$0xff]
        %v261 = vld [vmem:[%s162 + $0x2a8] sm:$0xff]
        %v262 = vld [vmem:[%s162 + $0x2b0] sm:$0xff]
        %v263 = vld [vmem:[%s162 + $0x2b8] sm:$0xff]
        %v264 = vld [vmem:[%s162 + $0x2c0] sm:$0xff]
        %v265 = vld [vmem:[%s162 + $0x2c8] sm:$0xff]
        %v266 = vld [vmem:[%s162 + $0x2d0] sm:$0xff]
        %v267 = vld [vmem:[%s162 + $0x2d8] sm:$0xff]
        %v268 = vld [vmem:[%s162 + $0x2e0] sm:$0xff]
        %v269 = vstv %s175
        %v270 = vmul.f32 %v176, %v269
        %v271 = vmul.f32 %v177, %v269
        %v272 = vmul.f32 %v178, %v269
        %v273 = vmul.f32 %v179, %v269
        %v274 = vmul.f32 %v180, %v269
        %v275 = vmul.f32 %v181, %v269
        %v276 = vmul.f32 %v182, %v269
        %v277 = vmul.f32 %v183, %v269
        %v278 = vmul.f32 %v184, %v269
        %v279 = vmul.f32 %v185, %v269
        %v280 = vmul.f32 %v186, %v269
        %v281 = vmul.f32 %v187, %v269
        %v282 = vmul.f32 %v188, %v269
        %v283 = vmul.f32 %v189, %v269
        %v284 = vmul.f32 %v190, %v269
        %v285 = vmul.f32 %v191, %v269
        %v286 = vmul.f32 %v192, %v269
        %v287 = vmul.f32 %v193, %v269
        %v288 = vmul.f32 %v194, %v269
        %v289 = vmul.f32 %v195, %v269
        %v290 = vmul.f32 %v196, %v269
        %v291 = vmul.f32 %v197, %v269
        %v292 = vmul.f32 %v198, %v269
        %v293 = vmul.f32 %v199, %v269
        %v294 = vmul.f32 %v200, %v269
        %v295 = vmul.f32 %v201, %v269
        %v296 = vmul.f32 %v202, %v269
        %v297 = vmul.f32 %v203, %v269
        %v298 = vmul.f32 %v204, %v269
        %v299 = vmul.f32 %v205, %v269
        %v300 = vmul.f32 %v206, %v269
        %v301 = vmul.f32 %v207, %v269
        %v302 = vmul.f32 %v208, %v269
        %v303 = vmul.f32 %v209, %v269
        %v304 = vmul.f32 %v210, %v269
        %v305 = vmul.f32 %v211, %v269
        %v306 = vmul.f32 %v212, %v269
        %v307 = vmul.f32 %v213, %v269
        %v308 = vmul.f32 %v214, %v269
        %v309 = vmul.f32 %v215, %v269
        %v310 = vmul.f32 %v216, %v269
        %v311 = vmul.f32 %v217, %v269
        %v312 = vmul.f32 %v218, %v269
        %v313 = vmul.f32 %v219, %v269
        %v314 = vmul.f32 %v220, %v269
        %v315 = vmul.f32 %v221, %v269
        %v316 = vmul.f32 %v222, %v269
        %v317 = vmul.f32 %v223, %v269
        %v318 = vmul.f32 %v224, %v269
        %v319 = vmul.f32 %v225, %v269
        %v320 = vmul.f32 %v226, %v269
        %v321 = vmul.f32 %v227, %v269
        %v322 = vmul.f32 %v228, %v269
        %v323 = vmul.f32 %v229, %v269
        %v324 = vmul.f32 %v230, %v269
        %v325 = vmul.f32 %v231, %v269
        %v326 = vmul.f32 %v232, %v269
        %v327 = vmul.f32 %v233, %v269
        %v328 = vmul.f32 %v234, %v269
        %v329 = vmul.f32 %v235, %v269
        %v330 = vmul.f32 %v236, %v269
        %v331 = vmul.f32 %v237, %v269
        %v332 = vmul.f32 %v238, %v269
        %v333 = vmul.f32 %v239, %v269
        %v334 = vmul.f32 %v240, %v269
        %v335 = vmul.f32 %v241, %v269
        %v336 = vmul.f32 %v242, %v269
        %v337 = vmul.f32 %v243, %v269
        %v338 = vmul.f32 %v244, %v269
        %v339 = vmul.f32 %v245, %v269
        %v340 = vmul.f32 %v246, %v269
        %v341 = vmul.f32 %v247, %v269
        %v342 = vmul.f32 %v248, %v269
        %v343 = vmul.f32 %v249, %v269
        %v344 = vmul.f32 %v250, %v269
        %v345 = vmul.f32 %v251, %v269
        %v346 = vmul.f32 %v252, %v269
        %v347 = vmul.f32 %v253, %v269
        %v348 = vmul.f32 %v254, %v269
        %v349 = vmul.f32 %v255, %v269
        %v350 = vmul.f32 %v256, %v269
        %v351 = vmul.f32 %v257, %v269
        %v352 = vmul.f32 %v258, %v269
        %v353 = vmul.f32 %v259, %v269
        %v354 = vmul.f32 %v260, %v269
        %v355 = vmul.f32 %v261, %v269
        %v356 = vmul.f32 %v262, %v269
        %v357 = vmul.f32 %v263, %v269
        %v358 = vmul.f32 %v264, %v269
        %v359 = vmul.f32 %v265, %v269
        %v360 = vmul.f32 %v266, %v269
        %v361 = vmul.f32 %v267, %v269
        %v362 = vmul.f32 %v268, %v269
        %363 = vst [vmem:[%s151] sm:$0xff] %v270
        %364 = vst [vmem:[%s151 + $0x8] sm:$0xff] %v271
        %vm365 = vcmask 359424
        %366 = vst.msk [vmem:[%s151 + $0x10] sm:$0xff] %vm365, %v272
        %367 = vst [vmem:[%s151 + $0x18] sm:$0xff] %v273
        %368 = vst [vmem:[%s151 + $0x20] sm:$0xff] %v274
        %369 = vst.msk [vmem:[%s151 + $0x28] sm:$0xff] %vm365, %v275
        %370 = vst [vmem:[%s151 + $0x30] sm:$0xff] %v276
        %371 = vst [vmem:[%s151 + $0x38] sm:$0xff] %v277
        %372 = vst.msk [vmem:[%s151 + $0x40] sm:$0xff] %vm365, %v278
        %373 = vst [vmem:[%s151 + $0x48] sm:$0xff] %v279
        %374 = vst [vmem:[%s151 + $0x50] sm:$0xff] %v280
        %375 = vst.msk [vmem:[%s151 + $0x58] sm:$0xff] %vm365, %v281
        %376 = vst [vmem:[%s151 + $0x60] sm:$0xff] %v282
        %377 = vst [vmem:[%s151 + $0x68] sm:$0xff] %v283
        %378 = vst.msk [vmem:[%s151 + $0x70] sm:$0xff] %vm365, %v284
        %379 = vst [vmem:[%s151 + $0x78] sm:$0xff] %v285
        %380 = vst [vmem:[%s151 + $0x80] sm:$0xff] %v286
        %381 = vst.msk [vmem:[%s151 + $0x88] sm:$0xff] %vm365, %v287
        %382 = vst [vmem:[%s151 + $0x90] sm:$0xff] %v288
        %383 = vst [vmem:[%s151 + $0x98] sm:$0xff] %v289
        %384 = vst.msk [vmem:[%s151 + $0xa0] sm:$0xff] %vm365, %v290
        %385 = vst [vmem:[%s151 + $0xa8] sm:$0xff] %v291
        %386 = vst [vmem:[%s151 + $0xb0] sm:$0xff] %v292
        %387 = vst.msk [vmem:[%s151 + $0xb8] sm:$0xff] %vm365, %v293
        %388 = vst [vmem:[%s151 + $0xc0] sm:$0xff] %v294
        %389 = vst [vmem:[%s151 + $0xc8] sm:$0xff] %v295
        %390 = vst.msk [vmem:[%s151 + $0xd0] sm:$0xff] %vm365, %v296
        %391 = vst [vmem:[%s151 + $0xd8] sm:$0xff] %v297
        %392 = vst [vmem:[%s151 + $0xe0] sm:$0xff] %v298
        %393 = vst.msk [vmem:[%s151 + $0xe8] sm:$0xff] %vm365, %v299
        %394 = vst [vmem:[%s151 + $0xf0] sm:$0xff] %v300
        %395 = vst [vmem:[%s151 + $0xf8] sm:$0xff] %v301
        %396 = vst.msk [vmem:[%s151 + $0x100] sm:$0xff] %vm365, %v302
        %397 = vst [vmem:[%s151 + $0x108] sm:$0xff] %v303
        %398 = vst [vmem:[%s151 + $0x110] sm:$0xff] %v304
        %399 = vst.msk [vmem:[%s151 + $0x118] sm:$0xff] %vm365, %v305
        %400 = vst [vmem:[%s151 + $0x120] sm:$0xff] %v306
        %401 = vst [vmem:[%s151 + $0x128] sm:$0xff] %v307
        %402 = vst.msk [vmem:[%s151 + $0x130] sm:$0xff] %vm365, %v308
        %403 = vst [vmem:[%s151 + $0x138] sm:$0xff] %v309
        %404 = vst [vmem:[%s151 + $0x140] sm:$0xff] %v310
        %405 = vst.msk [vmem:[%s151 + $0x148] sm:$0xff] %vm365, %v311
        %406 = vst [vmem:[%s151 + $0x150] sm:$0xff] %v312
        %407 = vst [vmem:[%s151 + $0x158] sm:$0xff] %v313
        %408 = vst.msk [vmem:[%s151 + $0x160] sm:$0xff] %vm365, %v314
        %409 = vst [vmem:[%s151 + $0x168] sm:$0xff] %v315
        %410 = vst [vmem:[%s151 + $0x170] sm:$0xff] %v316
        %411 = vst.msk [vmem:[%s151 + $0x178] sm:$0xff] %vm365, %v317
        %412 = vst [vmem:[%s151 + $0x180] sm:$0xff] %v318
        %413 = vst [vmem:[%s151 + $0x188] sm:$0xff] %v319
        %414 = vst.msk [vmem:[%s151 + $0x190] sm:$0xff] %vm365, %v320
        %415 = vst [vmem:[%s151 + $0x198] sm:$0xff] %v321
        %416 = vst [vmem:[%s151 + $0x1a0] sm:$0xff] %v322
        %417 = vst.msk [vmem:[%s151 + $0x1a8] sm:$0xff] %vm365, %v323
        %418 = vst [vmem:[%s151 + $0x1b0] sm:$0xff] %v324
        %419 = vst [vmem:[%s151 + $0x1b8] sm:$0xff] %v325
        %420 = vst.msk [vmem:[%s151 + $0x1c0] sm:$0xff] %vm365, %v326
        %421 = vst [vmem:[%s151 + $0x1c8] sm:$0xff] %v327
        %422 = vst [vmem:[%s151 + $0x1d0] sm:$0xff] %v328
        %423 = vst.msk [vmem:[%s151 + $0x1d8] sm:$0xff] %vm365, %v329
        %424 = vst [vmem:[%s151 + $0x1e0] sm:$0xff] %v330
        %425 = vst [vmem:[%s151 + $0x1e8] sm:$0xff] %v331
        %426 = vst.msk [vmem:[%s151 + $0x1f0] sm:$0xff] %vm365, %v332
        %427 = vst [vmem:[%s151 + $0x1f8] sm:$0xff] %v333
        %428 = vst [vmem:[%s151 + $0x200] sm:$0xff] %v334
        %429 = vst.msk [vmem:[%s151 + $0x208] sm:$0xff] %vm365, %v335
        %430 = vst [vmem:[%s151 + $0x210] sm:$0xff] %v336
        %431 = vst [vmem:[%s151 + $0x218] sm:$0xff] %v337
        %432 = vst.msk [vmem:[%s151 + $0x220] sm:$0xff] %vm365, %v338
        %433 = vst [vmem:[%s151 + $0x228] sm:$0xff] %v339
        %434 = vst [vmem:[%s151 + $0x230] sm:$0xff] %v340
        %435 = vst.msk [vmem:[%s151 + $0x238] sm:$0xff] %vm365, %v341
        %436 = vst [vmem:[%s151 + $0x240] sm:$0xff] %v342
        %437 = vst [vmem:[%s151 + $0x248] sm:$0xff] %v343
        %438 = vst.msk [vmem:[%s151 + $0x250] sm:$0xff] %vm365, %v344
        %439 = vst [vmem:[%s151 + $0x258] sm:$0xff] %v345
        %440 = vst [vmem:[%s151 + $0x260] sm:$0xff] %v346
        %441 = vst.msk [vmem:[%s151 + $0x268] sm:$0xff] %vm365, %v347
        %442 = vst [vmem:[%s151 + $0x270] sm:$0xff] %v348
        %443 = vst [vmem:[%s151 + $0x278] sm:$0xff] %v349
        %444 = vst.msk [vmem:[%s151 + $0x280] sm:$0xff] %vm365, %v350
        %445 = vst [vmem:[%s151 + $0x288] sm:$0xff] %v351
        %446 = vst [vmem:[%s151 + $0x290] sm:$0xff] %v352
        %447 = vst.msk [vmem:[%s151 + $0x298] sm:$0xff] %vm365, %v353
        %448 = vst [vmem:[%s151 + $0x2a0] sm:$0xff] %v354
        %449 = vst [vmem:[%s151 + $0x2a8] sm:$0xff] %v355
        %450 = vst.msk [vmem:[%s151 + $0x2b0] sm:$0xff] %vm365, %v356
        %451 = vst [vmem:[%s151 + $0x2b8] sm:$0xff] %v357
        %452 = vst [vmem:[%s151 + $0x2c0] sm:$0xff] %v358
        %453 = vst.msk [vmem:[%s151 + $0x2c8] sm:$0xff] %vm365, %v359
        %454 = vst [vmem:[%s151 + $0x2d0] sm:$0xff] %v360
        %455 = vst [vmem:[%s151 + $0x2d8] sm:$0xff] %v361
        %456 = vst.msk [vmem:[%s151 + $0x2e0] sm:$0xff] %vm365, %v362
        %s457 = sand.u32 %s69, 1
        %s458 = sand.u32 %s69, 1
        %s459 = smul.addr %s458, 744
        %s460 = scalar_lea.vmem [#allocation3], %s459
        // Predicated region
        $region29: #{tpu_custom_call.1} parent=27 // pred_check
          %p461 = pneg %p79
        $region30: #{tpu_custom_call.1} parent=27 // pred_check_branch
          %463 = sbr.rel (%p461) target = $region32
        $region31: #{tpu_custom_call.1} parent=27 // pred_region
          %s464 = smul.u32 31, %s14
          %s465 = ssub.s32 63, %s464
          %p466 = scmp.lt.s32.totalorder %s465, 31
          %s467 = scalar_select %p466, %s465, 31
          %s468 = smul.u32 128, %s467
          %s469 = smul.u32 %s468, 3
          %p470 = scmp.ne.s32.totalorder 0, %s469
          %s471 = smul.addr %s464, 3
          %s472 = smul.addr %s471, 8
          %s473 = scalar_lea.vmem %s2, %s472
          // Predicated region
          $region33: #{tpu_custom_call.1} parent=31 // pred_check
            %p474 = pneg %p470
          $region34: #{tpu_custom_call.1} parent=31 // pred_check_branch
            %476 = sbr.rel (%p474) target = $region36
          $region35: #{tpu_custom_call.1} parent=31 // pred_region
            // Predicated region
            $region37: #{tpu_custom_call.1} parent=35 // pred_check
              _
            $region38: #{tpu_custom_call.1} parent=35 // pred_check_branch
              %478 = sbr.rel (0) target = $region40
            $region39: #{tpu_custom_call.1} parent=35 // pred_region
              %s479 = sdiv.u32.pop %s467, 22
              %s480 = srem.u32.pop %s467, 22
              // While loop
              $region41: #{tpu_custom_call.1} parent=39 // loop_pre_header
                _
              $region42: #{tpu_custom_call.1} parent=39 // loop_header
                %s482 = sphi 0, %s484
                %p483 = scmp.ge.s32.totalorder %s482, %s479
                %s487 = sphi 0, %s624
                %s488 = sphi %s460, %s627
                %s489 = sphi %s473, %s628
              $region43: #{tpu_custom_call.1} parent=39 // loop_header_branch
                %486 = sbr.rel (%p483) target = $region47
              $region44: #{tpu_custom_call.1} parent=39 // loop_body
                %v490 = vld [vmem:[%s488] sm:$0xff]
                %491 = vst [vmem:[%s489] sm:$0xff] %v490
                %v492 = vld [vmem:[%s488 + $0x18] sm:$0xff]
                %493 = vst [vmem:[%s489 + $0x18] sm:$0xff] %v492
                %v494 = vld [vmem:[%s488 + $0x30] sm:$0xff]
                %495 = vst [vmem:[%s489 + $0x30] sm:$0xff] %v494
                %v496 = vld [vmem:[%s488 + $0x48] sm:$0xff]
                %497 = vst [vmem:[%s489 + $0x48] sm:$0xff] %v496
                %v498 = vld [vmem:[%s488 + $0x60] sm:$0xff]
                %499 = vst [vmem:[%s489 + $0x60] sm:$0xff] %v498
                %v500 = vld [vmem:[%s488 + $0x78] sm:$0xff]
                %501 = vst [vmem:[%s489 + $0x78] sm:$0xff] %v500
                %v502 = vld [vmem:[%s488 + $0x90] sm:$0xff]
                %503 = vst [vmem:[%s489 + $0x90] sm:$0xff] %v502
                %v504 = vld [vmem:[%s488 + $0xa8] sm:$0xff]
                %505 = vst [vmem:[%s489 + $0xa8] sm:$0xff] %v504
                %v506 = vld [vmem:[%s488 + $0xc0] sm:$0xff]
                %507 = vst [vmem:[%s489 + $0xc0] sm:$0xff] %v506
                %v508 = vld [vmem:[%s488 + $0xd8] sm:$0xff]
                %509 = vst [vmem:[%s489 + $0xd8] sm:$0xff] %v508
                %v510 = vld [vmem:[%s488 + $0xf0] sm:$0xff]
                %511 = vst [vmem:[%s489 + $0xf0] sm:$0xff] %v510
                %v512 = vld [vmem:[%s488 + $0x108] sm:$0xff]
                %513 = vst [vmem:[%s489 + $0x108] sm:$0xff] %v512
                %v514 = vld [vmem:[%s488 + $0x120] sm:$0xff]
                %515 = vst [vmem:[%s489 + $0x120] sm:$0xff] %v514
                %v516 = vld [vmem:[%s488 + $0x138] sm:$0xff]
                %517 = vst [vmem:[%s489 + $0x138] sm:$0xff] %v516
                %v518 = vld [vmem:[%s488 + $0x150] sm:$0xff]
                %519 = vst [vmem:[%s489 + $0x150] sm:$0xff] %v518
                %v520 = vld [vmem:[%s488 + $0x168] sm:$0xff]
                %521 = vst [vmem:[%s489 + $0x168] sm:$0xff] %v520
                %v522 = vld [vmem:[%s488 + $0x180] sm:$0xff]
                %523 = vst [vmem:[%s489 + $0x180] sm:$0xff] %v522
                %v524 = vld [vmem:[%s488 + $0x198] sm:$0xff]
                %525 = vst [vmem:[%s489 + $0x198] sm:$0xff] %v524
                %v526 = vld [vmem:[%s488 + $0x1b0] sm:$0xff]
                %527 = vst [vmem:[%s489 + $0x1b0] sm:$0xff] %v526
                %v528 = vld [vmem:[%s488 + $0x1c8] sm:$0xff]
                %529 = vst [vmem:[%s489 + $0x1c8] sm:$0xff] %v528
                %v530 = vld [vmem:[%s488 + $0x1e0] sm:$0xff]
                %531 = vst [vmem:[%s489 + $0x1e0] sm:$0xff] %v530
                %v532 = vld [vmem:[%s488 + $0x1f8] sm:$0xff]
                %533 = vst [vmem:[%s489 + $0x1f8] sm:$0xff] %v532
                %v534 = vld [vmem:[%s488 + $0x8] sm:$0xff]
                %535 = vst [vmem:[%s489 + $0x8] sm:$0xff] %v534
                %v536 = vld [vmem:[%s488 + $0x20] sm:$0xff]
                %537 = vst [vmem:[%s489 + $0x20] sm:$0xff] %v536
                %v538 = vld [vmem:[%s488 + $0x38] sm:$0xff]
                %539 = vst [vmem:[%s489 + $0x38] sm:$0xff] %v538
                %v540 = vld [vmem:[%s488 + $0x50] sm:$0xff]
                %541 = vst [vmem:[%s489 + $0x50] sm:$0xff] %v540
                %v542 = vld [vmem:[%s488 + $0x68] sm:$0xff]
                %543 = vst [vmem:[%s489 + $0x68] sm:$0xff] %v542
                %v544 = vld [vmem:[%s488 + $0x80] sm:$0xff]
                %545 = vst [vmem:[%s489 + $0x80] sm:$0xff] %v544
                %v546 = vld [vmem:[%s488 + $0x98] sm:$0xff]
                %547 = vst [vmem:[%s489 + $0x98] sm:$0xff] %v546
                %v548 = vld [vmem:[%s488 + $0xb0] sm:$0xff]
                %549 = vst [vmem:[%s489 + $0xb0] sm:$0xff] %v548
                %v550 = vld [vmem:[%s488 + $0xc8] sm:$0xff]
                %551 = vst [vmem:[%s489 + $0xc8] sm:$0xff] %v550
                %v552 = vld [vmem:[%s488 + $0xe0] sm:$0xff]
                %553 = vst [vmem:[%s489 + $0xe0] sm:$0xff] %v552
                %v554 = vld [vmem:[%s488 + $0xf8] sm:$0xff]
                %555 = vst [vmem:[%s489 + $0xf8] sm:$0xff] %v554
                %v556 = vld [vmem:[%s488 + $0x110] sm:$0xff]
                %557 = vst [vmem:[%s489 + $0x110] sm:$0xff] %v556
                %v558 = vld [vmem:[%s488 + $0x128] sm:$0xff]
                %559 = vst [vmem:[%s489 + $0x128] sm:$0xff] %v558
                %v560 = vld [vmem:[%s488 + $0x140] sm:$0xff]
                %561 = vst [vmem:[%s489 + $0x140] sm:$0xff] %v560
                %v562 = vld [vmem:[%s488 + $0x158] sm:$0xff]
                %563 = vst [vmem:[%s489 + $0x158] sm:$0xff] %v562
                %v564 = vld [vmem:[%s488 + $0x170] sm:$0xff]
                %565 = vst [vmem:[%s489 + $0x170] sm:$0xff] %v564
                %v566 = vld [vmem:[%s488 + $0x188] sm:$0xff]
                %567 = vst [vmem:[%s489 + $0x188] sm:$0xff] %v566
                %v568 = vld [vmem:[%s488 + $0x1a0] sm:$0xff]
                %569 = vst [vmem:[%s489 + $0x1a0] sm:$0xff] %v568
                %v570 = vld [vmem:[%s488 + $0x1b8] sm:$0xff]
                %571 = vst [vmem:[%s489 + $0x1b8] sm:$0xff] %v570
                %v572 = vld [vmem:[%s488 + $0x1d0] sm:$0xff]
                %573 = vst [vmem:[%s489 + $0x1d0] sm:$0xff] %v572
                %v574 = vld [vmem:[%s488 + $0x1e8] sm:$0xff]
                %575 = vst [vmem:[%s489 + $0x1e8] sm:$0xff] %v574
                %v576 = vld [vmem:[%s488 + $0x200] sm:$0xff]
                %577 = vst [vmem:[%s489 + $0x200] sm:$0xff] %v576
                %v578 = vld [vmem:[%s488 + $0x10] sm:$0xff]
                %579 = vst [vmem:[%s489 + $0x10] sm:$0xff] %v578
                %v580 = vld [vmem:[%s488 + $0x28] sm:$0xff]
                %581 = vst [vmem:[%s489 + $0x28] sm:$0xff] %v580
                %v582 = vld [vmem:[%s488 + $0x40] sm:$0xff]
                %583 = vst [vmem:[%s489 + $0x40] sm:$0xff] %v582
                %v584 = vld [vmem:[%s488 + $0x58] sm:$0xff]
                %585 = vst [vmem:[%s489 + $0x58] sm:$0xff] %v584
                %v586 = vld [vmem:[%s488 + $0x70] sm:$0xff]
                %587 = vst [vmem:[%s489 + $0x70] sm:$0xff] %v586
                %v588 = vld [vmem:[%s488 + $0x88] sm:$0xff]
                %589 = vst [vmem:[%s489 + $0x88] sm:$0xff] %v588
                %v590 = vld [vmem:[%s488 + $0xa0] sm:$0xff]
                %591 = vst [vmem:[%s489 + $0xa0] sm:$0xff] %v590
                %v592 = vld [vmem:[%s488 + $0xb8] sm:$0xff]
                %593 = vst [vmem:[%s489 + $0xb8] sm:$0xff] %v592
                %v594 = vld [vmem:[%s488 + $0xd0] sm:$0xff]
                %595 = vst [vmem:[%s489 + $0xd0] sm:$0xff] %v594
                %v596 = vld [vmem:[%s488 + $0xe8] sm:$0xff]
                %597 = vst [vmem:[%s489 + $0xe8] sm:$0xff] %v596
                %v598 = vld [vmem:[%s488 + $0x100] sm:$0xff]
                %599 = vst [vmem:[%s489 + $0x100] sm:$0xff] %v598
                %v600 = vld [vmem:[%s488 + $0x118] sm:$0xff]
                %601 = vst [vmem:[%s489 + $0x118] sm:$0xff] %v600
                %v602 = vld [vmem:[%s488 + $0x130] sm:$0xff]
                %603 = vst [vmem:[%s489 + $0x130] sm:$0xff] %v602
                %v604 = vld [vmem:[%s488 + $0x148] sm:$0xff]
                %605 = vst [vmem:[%s489 + $0x148] sm:$0xff] %v604
                %v606 = vld [vmem:[%s488 + $0x160] sm:$0xff]
                %607 = vst [vmem:[%s489 + $0x160] sm:$0xff] %v606
                %v608 = vld [vmem:[%s488 + $0x178] sm:$0xff]
                %609 = vst [vmem:[%s489 + $0x178] sm:$0xff] %v608
                %v610 = vld [vmem:[%s488 + $0x190] sm:$0xff]
                %611 = vst [vmem:[%s489 + $0x190] sm:$0xff] %v610
                %v612 = vld [vmem:[%s488 + $0x1a8] sm:$0xff]
                %613 = vst [vmem:[%s489 + $0x1a8] sm:$0xff] %v612
                %v614 = vld [vmem:[%s488 + $0x1c0] sm:$0xff]
                %615 = vst [vmem:[%s489 + $0x1c0] sm:$0xff] %v614
                %v616 = vld [vmem:[%s488 + $0x1d8] sm:$0xff]
                %617 = vst [vmem:[%s489 + $0x1d8] sm:$0xff] %v616
                %v618 = vld [vmem:[%s488 + $0x1f0] sm:$0xff]
                %619 = vst [vmem:[%s489 + $0x1f0] sm:$0xff] %v618
                %v620 = vld [vmem:[%s488 + $0x208] sm:$0xff]
                %621 = vst [vmem:[%s489 + $0x208] sm:$0xff] %v620
                %s622 = sadd.s32 1, %s487
                %p623 = scmp.ge.s32.totalorder %s622, %s479
                %s624 = scalar_select %p623, 0, %s622
                %s625 = smul.u32 %s624, 528
                %s626 = smul.u32 %s624, 528
                %s627 = scalar_lea.vmem %s460, %s625 [#allocation3]
                %s628 = scalar_lea.vmem %s473, %s626
              $region45: #{tpu_custom_call.1} parent=39 // loop_footer
                %s484 = sadd.s32 %s482, 1
              $region46: #{tpu_custom_call.1} parent=39 // loop_footer_branch
                %481 = sbr.rel target = $region42
              $region47: #{tpu_custom_call.1} parent=39 // loop_exit
                _
              %s629 = sdiv.u32.pop %s467, 22
              %s630 = srem.u32.pop %s467, 22
              %s631 = smul.u32 %s629, 22
              %s632 = smul.u32 24, %s631
              %s633 = scalar_lea.vmem %s460, %s632 [#allocation3]
              %s634 = smul.u32 24, %s631
              %s635 = scalar_lea.vmem %s473, %s634
              // While loop
              $region48: #{tpu_custom_call.1} parent=39 // loop_pre_header
                _
              $region49: #{tpu_custom_call.1} parent=39 // loop_header
                %s637 = sphi 0, %s639
                %p638 = scmp.ge.s32.totalorder %s637, %s630
                %s642 = sphi 0, %s653
                %s643 = sphi %s633, %s656
                %s644 = sphi %s635, %s657
              $region50: #{tpu_custom_call.1} parent=39 // loop_header_branch
                %641 = sbr.rel (%p638) target = $region54
              $region51: #{tpu_custom_call.1} parent=39 // loop_body
                %v645 = vld [vmem:[%s643] sm:$0xff]
                %646 = vst [vmem:[%s644] sm:$0xff] %v645
                %v647 = vld [vmem:[%s643 + $0x8] sm:$0xff]
                %648 = vst [vmem:[%s644 + $0x8] sm:$0xff] %v647
                %v649 = vld [vmem:[%s643 + $0x10] sm:$0xff]
                %650 = vst [vmem:[%s644 + $0x10] sm:$0xff] %v649
                %s651 = sadd.s32 1, %s642
                %p652 = scmp.ge.s32.totalorder %s651, %s630
                %s653 = scalar_select %p652, 0, %s651
                %s654 = smul.u32 %s653, 24
                %s655 = smul.u32 %s653, 24
                %s656 = scalar_lea.vmem %s633, %s654 [#allocation3]
                %s657 = scalar_lea.vmem %s635, %s655
              $region52: #{tpu_custom_call.1} parent=39 // loop_footer
                %s639 = sadd.s32 %s637, 1
              $region53: #{tpu_custom_call.1} parent=39 // loop_footer_branch
                %636 = sbr.rel target = $region49
              $region54: #{tpu_custom_call.1} parent=39 // loop_exit
                _
            $region40: #{tpu_custom_call.1} parent=35 // pred_fallthru
              _
            // Predicated region
            $region55: #{tpu_custom_call.1} parent=35 // pred_check
              _
            $region56: #{tpu_custom_call.1} parent=35 // pred_check_branch
              %659 = sbr.rel target = $region58
            $region57: #{tpu_custom_call.1} parent=35 // pred_region
              _
            $region58: #{tpu_custom_call.1} parent=35 // pred_fallthru
              _
          $region36: #{tpu_custom_call.1} parent=31 // pred_fallthru
            _
          %660 = vnop
        $region32: #{tpu_custom_call.1} parent=27 // pred_fallthru
          _
      $region28: #{tpu_custom_call.1} parent=5 // pred_fallthru
        _
      %p661 = scmp.le.s32.totalorder 2, %s9
      // Predicated region
      $region59: #{tpu_custom_call.1} parent=5 // pred_check
        %p662 = pneg %p661
      $region60: #{tpu_custom_call.1} parent=5 // pred_check_branch
        %664 = sbr.rel (%p662) target = $region62
      $region61: #{tpu_custom_call.1} parent=5 // pred_region
        %s665 = ssub.s32 %s9, 2
        // Predicated region
        $region63: #{tpu_custom_call.1} parent=61 // pred_check
          %p666 = pneg %p85
        $region64: #{tpu_custom_call.1} parent=61 // pred_check_branch
          %668 = sbr.rel (%p666) target = $region66
        $region65: #{tpu_custom_call.1} parent=61 // pred_region
          %s669 = sand.u32 %s70, 1
          %s670 = sand.u32 %s70, 1
          %s671 = smul.addr %s670, 744
          %s672 = scalar_lea.vmem [#allocation3], %s671
        $region66: #{tpu_custom_call.1} parent=61 // pred_fallthru
          _
      $region62: #{tpu_custom_call.1} parent=5 // pred_fallthru
        _
    $region6: #{tpu_custom_call.1} parent=1 // loop_footer
      %s13 = sadd.s32 1, %s9
    $region7: #{tpu_custom_call.1} parent=1 // loop_footer_branch
      %8 = sbr.rel target = $region3
    $region8: #{tpu_custom_call.1} parent=1 // loop_exit
      _

</llo_original>
